<compile_context>
chip_gen: v7x
topology: tpu7x:2x2x1
jax: 0.10.0
libtpu: 0.0.40
codegen_flags: <defaults>
</compile_context>

<pallas_src>
import numpy as np
import jax
import jax.numpy as jnp
from jax.experimental import pallas as pl
from jax.experimental.pallas import tpu as pltpu

F_IN = 8         # in_feats
F_OUT = 16       # out_feats
F_EDGE = 8       # edge feature dim
N_NODES = 8
N_EDGES = 16
N_GRAPHS = 4     # batch of graphs -> grid axis
NEG_SLOPE = 0.01  # F.leaky_relu default negative_slope


def kmpnn_kernel(efeat_ref, zrep_ref, zcatT_ref, mask_ref,
                 w12_ref, b12_ref, wa_ref, ba_ref, smat_ref, bias_ref,
                 out_ref):
    f32 = jnp.float32
    kdim = smat_ref.shape[0]          # F_in * F_out
    n_nodes = out_ref.shape[0]

    # Fused edge_func1 | edge_func2: one [E, F_e] @ [F_e, 2*F_in*F_out] matmul.
    w12 = jnp.dot(efeat_ref[...], w12_ref[...],
                  preferred_element_type=f32) + b12_ref[...]          # [E, 2*K]

    # Per-edge messages reduced over F_in, stacked [msg1 ; msg2] -> [2E, F_out]
    # with a single K = F_in*F_out matmul.  z_rep is the lane-replicated src
    # feature (z_rep[e, i*F_out + o] == z_src[e, i]); built wrapper-side so no
    # MXU push is spent on the replication.
    z_rep = zrep_ref[...]                                             # [E, K]
    zw = jnp.concatenate([z_rep * w12[:, :kdim],
                          z_rep * w12[:, kdim:]], axis=0)             # [2E, K]
    msg = jnp.dot(zw, smat_ref[...], preferred_element_type=f32)      # [2E, F_out]

    # Fused edge attention: leaky_relu([wa_src|wa_dst] @ [z_src;z_dst]^T + b).
    a_row = jnp.dot(wa_ref[...], zcatT_ref[...],
                    preferred_element_type=f32) + ba_ref[...]         # [1, E]
    a_row = jnp.where(a_row >= 0, a_row, NEG_SLOPE * a_row)

    # Both masked per-destination softmaxes in ONE pass: mask is
    # [2N, E] = [etype-0 incidence ; etype-1 incidence].
    mask = mask_ref[...]
    logits = jnp.where(mask > 0, a_row, jnp.float32(-1e30))           # [2N, E]
    mx = jnp.max(logits, axis=1, keepdims=True)
    p = jnp.exp(logits - mx) * mask
    s = jnp.sum(p, axis=1, keepdims=True)
    inv = pl.reciprocal(s, approx=True)                               # EUP slot
    alpha = p * jnp.where(s > 0, inv, 0.0)                            # rows w/o edges -> 0

    # Single aggregation matmul: [N, 2E] @ [2E, F_out]
    #   = alpha0 @ msg1 + alpha1 @ msg2.
    alpha2 = jnp.concatenate([alpha[:n_nodes, :], alpha[n_nodes:, :]], axis=1)
    rst = jnp.dot(alpha2, msg, preferred_element_type=f32)            # [N, F_out]
    out_ref[...] = rst + bias_ref[...]


def kmpnn_forward(feat, efeat, src, dst, etype, params):
    """feat: [B,N,F_in], efeat: [B,E,F_e], src/dst/etype: [B,E] int."""
    B, N, f_in = feat.shape
    E = efeat.shape[1]
    f_e = efeat.shape[2]
    f_out = params["bias"].shape[0]
    kdim = f_in * f_out

    # ---- wrapper glue (graph gathers / masks / fused params); for a static
    # graph the gathers and masks can be cached on device across calls. ----
    z_src = jnp.take_along_axis(feat, src[..., None], axis=1)         # [B, E, F_in]
    z_dst = jnp.take_along_axis(feat, dst[..., None], axis=1)
    # lane-replicated src features: z_rep[b, e, i*F_out + o] == z_src[b, e, i]
    z_rep = jnp.repeat(z_src, f_out, axis=-1)                         # [B, E, F_in*F_out]
    # stacked attention features [z_src ; z_dst]^T per graph
    zcatT = jnp.concatenate([z_src, z_dst], axis=-1).transpose(0, 2, 1)  # [B, 2*F_in, E]

    node_ids = jnp.arange(N)[:, None]                                 # [N, 1]
    m0 = (dst[:, None, :] == node_ids[None]) & (etype[:, None, :] == 0)
    m1 = (dst[:, None, :] == node_ids[None]) & (etype[:, None, :] == 1)
    mask = jnp.concatenate([m0, m1], axis=1).astype(jnp.float32)      # [B, 2N, E]

    # fused edge_func1|edge_func2 weights / biases
    w12 = jnp.concatenate([params["w_ef1"], params["w_ef2"]], axis=1)   # [F_e, 2*K]
    b12 = jnp.concatenate([params["b_ef1"], params["b_ef2"]])[None, :]  # [1, 2*K]
    # fused attention projection row
    wa = params["w_attn"].T                                             # [1, 2*F_in]
    ba = params["b_attn"].reshape(1, 1)
    # constant sum-scatter matrix, built once in numpy
    S = jnp.asarray(np.tile(np.eye(f_out, dtype=np.float32), (f_in, 1)))  # [K, F_out]
    bias = params["bias"].reshape(1, -1)

    def batched(shape):
        return pl.BlockSpec((None,) + shape, lambda b: (b,) + (0,) * len(shape))

    def shared(shape):
        return pl.BlockSpec(shape, lambda b: (0,) * len(shape))

    return pl.pallas_call(
        kmpnn_kernel,
        out_shape=jax.ShapeDtypeStruct((B, N, f_out), jnp.float32),
        grid_spec=pltpu.PrefetchScalarGridSpec(
            num_scalar_prefetch=0,
            grid=(B,),
            in_specs=[
                batched((E, f_e)),          # efeat
                batched((E, kdim)),         # z_rep
                batched((2 * f_in, E)),     # zcatT
                batched((2 * N, E)),        # mask (etype0 ; etype1)
                shared((f_e, 2 * kdim)),    # w12
                shared((1, 2 * kdim)),      # b12
                shared((1, 2 * f_in)),      # wa
                shared((1, 1)),             # ba
                shared((kdim, f_out)),      # S
                shared((1, f_out)),         # bias
            ],
            out_specs=batched((N, f_out)),
        ),
        compiler_params=pltpu.CompilerParams(
            dimension_semantics=("parallel",)),
    )(efeat, z_rep, zcatT, mask, w12, b12, wa, ba, S, bias)


def kmpnn_reference(feat, efeat, src, dst, etype, params):
    """Pure numpy reference mirroring the PyTorch/DGL forward (per graph)."""
    feat = np.asarray(feat); efeat = np.asarray(efeat)
    src = np.asarray(src); dst = np.asarray(dst); etype = np.asarray(etype)
    B, N, f_in = feat.shape
    E = efeat.shape[1]
    f_out = params["bias"].shape[0]
    w_ef1 = np.asarray(params["w_ef1"]); b_ef1 = np.asarray(params["b_ef1"])
    w_ef2 = np.asarray(params["w_ef2"]); b_ef2 = np.asarray(params["b_ef2"])
    w_attn = np.asarray(params["w_attn"]); b_attn = np.asarray(params["b_attn"])
    bias = np.asarray(params["bias"])
    out = np.zeros((B, N, f_out), np.float32)
    for b in range(B):
        w1 = (efeat[b] @ w_ef1 + b_ef1).reshape(E, f_in, f_out)
        w2 = (efeat[b] @ w_ef2 + b_ef2).reshape(E, f_in, f_out)
        z_src = feat[b][src[b]]; z_dst = feat[b][dst[b]]
        a = np.concatenate([z_src, z_dst], axis=1) @ w_attn + b_attn
        a = np.where(a >= 0, a, NEG_SLOPE * a)[:, 0]              # [E]
        m1 = z_src[:, :, None] * w1                               # [E, F_in, F_out]
        m2 = z_src[:, :, None] * w2
        rst = np.zeros((N, f_out), np.float32)
        for t, m in ((0, m1), (1, m2)):
            for i in range(N):
                idx = np.nonzero((dst[b] == i) & (etype[b] == t))[0]
                if idx.size == 0:
                    continue
                logits = a[idx]
                ex = np.exp(logits - logits.max())
                alpha = ex / ex.sum()
                neigh = (alpha[:, None, None] * m[idx]).sum(axis=0)   # [F_in, F_out]
                rst[i] += neigh.sum(axis=0)                           # .sum(dim=1)
        out[b] = rst + bias
    return out


if __name__ == "__main__":
    key = jax.random.PRNGKey(0)
    k = jax.random.split(key, 10)
    feat = jax.random.normal(k[0], (N_GRAPHS, N_NODES, F_IN), jnp.float32)
    efeat = jax.random.normal(k[1], (N_GRAPHS, N_EDGES, F_EDGE), jnp.float32)
    src = jax.random.randint(k[2], (N_GRAPHS, N_EDGES), 0, N_NODES)
    dst = jax.random.randint(k[3], (N_GRAPHS, N_EDGES), 0, N_NODES)
    etype = jax.random.randint(k[4], (N_GRAPHS, N_EDGES), 0, 2)

    params = {
        "w_ef1": 0.1 * jax.random.normal(k[5], (F_EDGE, F_IN * F_OUT), jnp.float32),
        "b_ef1": 0.01 * jax.random.normal(k[6], (F_IN * F_OUT,), jnp.float32),
        "w_ef2": 0.1 * jax.random.normal(k[7], (F_EDGE, F_IN * F_OUT), jnp.float32),
        "b_ef2": 0.01 * jax.random.normal(k[8], (F_IN * F_OUT,), jnp.float32),
        "w_attn": 0.1 * jax.random.normal(k[9], (2 * F_IN, 1), jnp.float32),
        "b_attn": jnp.zeros((1,), jnp.float32),
        "bias": jnp.zeros((F_OUT,), jnp.float32),   # nn.init.zeros_ per reset_parameters
    }

    out = jax.block_until_ready(kmpnn_forward(feat, efeat, src, dst, etype, params))
    ref = kmpnn_reference(feat, efeat, src, dst, etype, params)
    # tolerance accounts for pl.reciprocal(approx=True) in the softmax denom
    np.testing.assert_allclose(np.asarray(out), ref, rtol=5e-3, atol=5e-3)
    print("KERNEL_OK")
</pallas_src>

<mosaic_0001>
module attributes {stable_mosaic.version = 11 : i64} {
  func.func @kmpnn_kernel(%arg0: i32, %arg1: memref<1x16x8xf32, #tpu.memory_space<vmem>>, %arg2: memref<1x16x128xf32, #tpu.memory_space<vmem>>, %arg3: memref<1x16x16xf32, #tpu.memory_space<vmem>>, %arg4: memref<1x16x16xf32, #tpu.memory_space<vmem>>, %arg5: memref<8x256xf32, #tpu.memory_space<vmem>>, %arg6: memref<1x256xf32, #tpu.memory_space<vmem>>, %arg7: memref<1x16xf32, #tpu.memory_space<vmem>>, %arg8: memref<1x1xf32, #tpu.memory_space<vmem>>, %arg9: memref<128x16xf32, #tpu.memory_space<vmem>>, %arg10: memref<1x16xf32, #tpu.memory_space<vmem>>, %arg11: memref<1x8x16xf32, #tpu.memory_space<vmem>>) attributes {dimension_semantics = [#tpu.dimension_semantics<parallel>], iteration_bounds = array<i64: 4>, scalar_prefetch = 0 : i64, scratch_operands = 0 : i64, tpu.core_type = #tpu.core_type<tc>, window_params = [{transform_indices = @transform_0, window_bounds = array<i64: 1, 16, 8>}, {transform_indices = @transform_1, window_bounds = array<i64: 1, 16, 128>}, {transform_indices = @transform_2, window_bounds = array<i64: 1, 16, 16>}, {transform_indices = @transform_3, window_bounds = array<i64: 1, 16, 16>}, {pipeline_mode = #tpu.pipeline_mode<synchronous>, transform_indices = @transform_4, window_bounds = array<i64: 8, 256>}, {pipeline_mode = #tpu.pipeline_mode<synchronous>, transform_indices = @transform_5, window_bounds = array<i64: 1, 256>}, {pipeline_mode = #tpu.pipeline_mode<synchronous>, transform_indices = @transform_6, window_bounds = array<i64: 1, 16>}, {pipeline_mode = #tpu.pipeline_mode<synchronous>, transform_indices = @transform_7, window_bounds = array<i64: 1, 1>}, {pipeline_mode = #tpu.pipeline_mode<synchronous>, transform_indices = @transform_8, window_bounds = array<i64: 128, 16>}, {pipeline_mode = #tpu.pipeline_mode<synchronous>, transform_indices = @transform_9, window_bounds = array<i64: 1, 16>}, {transform_indices = @transform_10, window_bounds = array<i64: 1, 8, 16>}]} {
    %c0 = arith.constant 0 : index
    %c0_0 = arith.constant 0 : index
    %c0_1 = arith.constant 0 : index
    %0 = vector.load %arg1[%c0, %c0_0, %c0_1] : memref<1x16x8xf32, #tpu.memory_space<vmem>>, vector<1x16x8xf32>
    %1 = vector.shape_cast %0 : vector<1x16x8xf32> to vector<16x8xf32>
    %c0_2 = arith.constant 0 : index
    %c0_3 = arith.constant 0 : index
    %2 = vector.load %arg5[%c0_2, %c0_3] : memref<8x256xf32, #tpu.memory_space<vmem>>, vector<8x256xf32>
    %cst = arith.constant dense<0.000000e+00> : vector<16x256xf32>
    %3 = tpu.matmul %1, %2, %cst {dimension_numbers = #tpu.dot_dimension_numbers<[1], [0], [0], [1], [0, 0, 1, 1], [], []>} : vector<16x8xf32>, vector<8x256xf32>, vector<16x256xf32> -> vector<16x256xf32>
    %c0_4 = arith.constant 0 : index
    %c0_5 = arith.constant 0 : index
    %4 = vector.load %arg6[%c0_4, %c0_5] : memref<1x256xf32, #tpu.memory_space<vmem>>, vector<1x256xf32>
    %5 = vector.broadcast %4 : vector<1x256xf32> to vector<16x256xf32>
    %6 = arith.addf %3, %5 : vector<16x256xf32>
    %c0_6 = arith.constant 0 : index
    %c0_7 = arith.constant 0 : index
    %c0_8 = arith.constant 0 : index
    %7 = vector.load %arg2[%c0_6, %c0_7, %c0_8] : memref<1x16x128xf32, #tpu.memory_space<vmem>>, vector<1x16x128xf32>
    %8 = vector.shape_cast %7 : vector<1x16x128xf32> to vector<16x128xf32>
    %9 = vector.extract_strided_slice %6 {offsets = [0, 0], sizes = [16, 128], strides = [1, 1]} : vector<16x256xf32> to vector<16x128xf32>
    %10 = arith.mulf %8, %9 : vector<16x128xf32>
    %11 = vector.extract_strided_slice %6 {offsets = [0, 128], sizes = [16, 128], strides = [1, 1]} : vector<16x256xf32> to vector<16x128xf32>
    %12 = arith.mulf %8, %11 : vector<16x128xf32>
    %13 = tpu.concatenate %10, %12 in 0 : vector<16x128xf32>, vector<16x128xf32> -> vector<32x128xf32>
    %c0_9 = arith.constant 0 : index
    %c0_10 = arith.constant 0 : index
    %14 = vector.load %arg9[%c0_9, %c0_10] : memref<128x16xf32, #tpu.memory_space<vmem>>, vector<128x16xf32>
    %cst_11 = arith.constant dense<0.000000e+00> : vector<32x16xf32>
    %15 = tpu.matmul %13, %14, %cst_11 {dimension_numbers = #tpu.dot_dimension_numbers<[1], [0], [0], [1], [0, 0, 1, 1], [], []>} : vector<32x128xf32>, vector<128x16xf32>, vector<32x16xf32> -> vector<32x16xf32>
    %c0_12 = arith.constant 0 : index
    %c0_13 = arith.constant 0 : index
    %16 = vector.load %arg7[%c0_12, %c0_13] : memref<1x16xf32, #tpu.memory_space<vmem>>, vector<1x16xf32>
    %c0_14 = arith.constant 0 : index
    %c0_15 = arith.constant 0 : index
    %c0_16 = arith.constant 0 : index
    %17 = vector.load %arg3[%c0_14, %c0_15, %c0_16] : memref<1x16x16xf32, #tpu.memory_space<vmem>>, vector<1x16x16xf32>
    %18 = vector.shape_cast %17 : vector<1x16x16xf32> to vector<16x16xf32>
    %cst_17 = arith.constant dense<0.000000e+00> : vector<1x16xf32>
    %19 = tpu.matmul %16, %18, %cst_17 {dimension_numbers = #tpu.dot_dimension_numbers<[1], [0], [0], [1], [0, 0, 1, 1], [], []>} : vector<1x16xf32>, vector<16x16xf32>, vector<1x16xf32> -> vector<1x16xf32>
    %c0_18 = arith.constant 0 : index
    %c0_19 = arith.constant 0 : index
    %20 = vector.load %arg8[%c0_18, %c0_19] : memref<1x1xf32, #tpu.memory_space<vmem>>, vector<1x1xf32>
    %21 = vector.broadcast %20 : vector<1x1xf32> to vector<1x16xf32>
    %22 = arith.addf %19, %21 : vector<1x16xf32>
    %cst_20 = arith.constant 0.000000e+00 : f32
    %23 = vector.broadcast %cst_20 : f32 to vector<1x16xf32>
    %24 = arith.cmpf oge, %22, %23 : vector<1x16xf32>
    %cst_21 = arith.constant 0.00999999977 : f32
    %25 = vector.broadcast %cst_21 : f32 to vector<1x16xf32>
    %26 = arith.mulf %25, %22 : vector<1x16xf32>
    %27 = arith.select %24, %22, %26 : vector<1x16xi1>, vector<1x16xf32>
    %c0_22 = arith.constant 0 : index
    %c0_23 = arith.constant 0 : index
    %c0_24 = arith.constant 0 : index
    %28 = vector.load %arg4[%c0_22, %c0_23, %c0_24] : memref<1x16x16xf32, #tpu.memory_space<vmem>>, vector<1x16x16xf32>
    %29 = vector.shape_cast %28 : vector<1x16x16xf32> to vector<16x16xf32>
    %cst_25 = arith.constant 0.000000e+00 : f32
    %30 = vector.broadcast %cst_25 : f32 to vector<16x16xf32>
    %31 = arith.cmpf ogt, %29, %30 : vector<16x16xf32>
    %cst_26 = arith.constant -1.000000e+30 : f32
    %32 = vector.shape_cast %27 : vector<1x16xf32> to vector<1x16xf32>
    %33 = vector.broadcast %32 : vector<1x16xf32> to vector<16x16xf32>
    %34 = vector.broadcast %cst_26 : f32 to vector<16x16xf32>
    %35 = arith.select %31, %33, %34 : vector<16x16xi1>, vector<16x16xf32>
    %cst_27 = arith.constant dense<0xFF800000> : vector<16xf32>
    %36 = vector.multi_reduction <maximumf>, %35, %cst_27 [1] : vector<16x16xf32> to vector<16xf32>
    %37 = vector.shape_cast %36 : vector<16xf32> to vector<16x1xf32>
    %38 = vector.broadcast %37 : vector<16x1xf32> to vector<16x16xf32>
    %39 = arith.subf %35, %38 : vector<16x16xf32>
    %40 = math.exp %39 : vector<16x16xf32>
    %41 = arith.mulf %40, %29 : vector<16x16xf32>
    %cst_28 = arith.constant dense<0.000000e+00> : vector<16xf32>
    %42 = vector.multi_reduction <add>, %41, %cst_28 [1] : vector<16x16xf32> to vector<16xf32>
    %43 = vector.shape_cast %42 : vector<16xf32> to vector<16x1xf32>
    %44 = tpu.reciprocal %43 {approx = true} : vector<16x1xf32> -> vector<16x1xf32>
    %cst_29 = arith.constant 0.000000e+00 : f32
    %45 = vector.broadcast %cst_29 : f32 to vector<16x1xf32>
    %46 = arith.cmpf ogt, %43, %45 : vector<16x1xf32>
    %cst_30 = arith.constant 0.000000e+00 : f32
    %47 = vector.broadcast %cst_30 : f32 to vector<16x1xf32>
    %48 = arith.select %46, %44, %47 : vector<16x1xi1>, vector<16x1xf32>
    %49 = vector.broadcast %48 : vector<16x1xf32> to vector<16x16xf32>
    %50 = arith.mulf %41, %49 : vector<16x16xf32>
    %51 = vector.extract_strided_slice %50 {offsets = [0, 0], sizes = [8, 16], strides = [1, 1]} : vector<16x16xf32> to vector<8x16xf32>
    %52 = vector.extract_strided_slice %50 {offsets = [8, 0], sizes = [8, 16], strides = [1, 1]} : vector<16x16xf32> to vector<8x16xf32>
    %53 = tpu.concatenate %51, %52 in 1 : vector<8x16xf32>, vector<8x16xf32> -> vector<8x32xf32>
    %cst_31 = arith.constant dense<0.000000e+00> : vector<8x16xf32>
    %54 = tpu.matmul %53, %15, %cst_31 {dimension_numbers = #tpu.dot_dimension_numbers<[1], [0], [0], [1], [0, 0, 1, 1], [], []>} : vector<8x32xf32>, vector<32x16xf32>, vector<8x16xf32> -> vector<8x16xf32>
    %c0_32 = arith.constant 0 : index
    %c0_33 = arith.constant 0 : index
    %55 = vector.load %arg10[%c0_32, %c0_33] : memref<1x16xf32, #tpu.memory_space<vmem>>, vector<1x16xf32>
    %56 = vector.broadcast %55 : vector<1x16xf32> to vector<8x16xf32>
    %57 = arith.addf %54, %56 : vector<8x16xf32>
    %c0_34 = arith.constant 0 : index
    %c0_35 = arith.constant 0 : index
    %c0_36 = arith.constant 0 : index
    %58 = vector.load %arg11[%c0_34, %c0_35, %c0_36] : memref<1x8x16xf32, #tpu.memory_space<vmem>>, vector<1x8x16xf32>
    %59 = vector.shape_cast %58 : vector<1x8x16xf32> to vector<8x16xf32>
    %60 = vector.shape_cast %57 : vector<8x16xf32> to vector<1x8x16xf32>
    tpu.vector_store %arg11[%c0_34, %c0_35, %c0_36], %60 {strides = array<i32>} : memref<1x8x16xf32, #tpu.memory_space<vmem>>, vector<1x8x16xf32>,
    return
  }
  func.func @transform_0(%arg0: i32) -> (i32, i32, i32) {
    %c0_i32 = arith.constant 0 : i32
    %c0_i32_0 = arith.constant 0 : i32
    %c0_i32_1 = arith.constant 0 : i32
    return %arg0, %c0_i32, %c0_i32_0 : i32, i32, i32
  }
  func.func @transform_1(%arg0: i32) -> (i32, i32, i32) {
    %c0_i32 = arith.constant 0 : i32
    %c0_i32_0 = arith.constant 0 : i32
    %c0_i32_1 = arith.constant 0 : i32
    return %arg0, %c0_i32, %c0_i32_0 : i32, i32, i32
  }
  func.func @transform_2(%arg0: i32) -> (i32, i32, i32) {
    %c0_i32 = arith.constant 0 : i32
    %c0_i32_0 = arith.constant 0 : i32
    %c0_i32_1 = arith.constant 0 : i32
    return %arg0, %c0_i32, %c0_i32_0 : i32, i32, i32
  }
  func.func @transform_3(%arg0: i32) -> (i32, i32, i32) {
    %c0_i32 = arith.constant 0 : i32
    %c0_i32_0 = arith.constant 0 : i32
    %c0_i32_1 = arith.constant 0 : i32
    return %arg0, %c0_i32, %c0_i32_0 : i32, i32, i32
  }
  func.func @transform_4(%arg0: i32) -> (i32, i32) {
    %c0_i32 = arith.constant 0 : i32
    %c0_i32_0 = arith.constant 0 : i32
    %c0_i32_1 = arith.constant 0 : i32
    return %c0_i32, %c0_i32_0 : i32, i32
  }
  func.func @transform_5(%arg0: i32) -> (i32, i32) {
    %c0_i32 = arith.constant 0 : i32
    %c0_i32_0 = arith.constant 0 : i32
    %c0_i32_1 = arith.constant 0 : i32
    return %c0_i32, %c0_i32_0 : i32, i32
  }
  func.func @transform_6(%arg0: i32) -> (i32, i32) {
    %c0_i32 = arith.constant 0 : i32
    %c0_i32_0 = arith.constant 0 : i32
    %c0_i32_1 = arith.constant 0 : i32
    return %c0_i32, %c0_i32_0 : i32, i32
  }
  func.func @transform_7(%arg0: i32) -> (i32, i32) {
    %c0_i32 = arith.constant 0 : i32
    %c0_i32_0 = arith.constant 0 : i32
    %c0_i32_1 = arith.constant 0 : i32
    return %c0_i32, %c0_i32_0 : i32, i32
  }
  func.func @transform_8(%arg0: i32) -> (i32, i32) {
    %c0_i32 = arith.constant 0 : i32
    %c0_i32_0 = arith.constant 0 : i32
    %c0_i32_1 = arith.constant 0 : i32
    return %c0_i32, %c0_i32_0 : i32, i32
  }
  func.func @transform_9(%arg0: i32) -> (i32, i32) {
    %c0_i32 = arith.constant 0 : i32
    %c0_i32_0 = arith.constant 0 : i32
    %c0_i32_1 = arith.constant 0 : i32
    return %c0_i32, %c0_i32_0 : i32, i32
  }
  func.func @transform_10(%arg0: i32) -> (i32, i32, i32) {
    %c0_i32 = arith.constant 0 : i32
    %c0_i32_0 = arith.constant 0 : i32
    %c0_i32_1 = arith.constant 0 : i32
    return %arg0, %c0_i32, %c0_i32_0 : i32, i32, i32
  }
}

</mosaic_0001>

<llo_original>
// kernel: tpu_custom_call.1
$region0: #{tpu_custom_call.1}
  #allocation0 [shape = 'u32[]', space=smem, size = 0x4, offset = 0x4, fixed_abs, tag = 'smem constant byte address 0x4 - core index']
  #allocation1 [shape = 'u32[144,128]{1,0:T(1,128)}', space=vmem, size = 0x12000, scoped, tag = 'internal scratch']
  #allocation2 [shape = 'f32[1,1]{1,0:T(1,128)S(1)}', space=vmem, size = 0x200, scoped, tag = 'scoped memory for tpu_custom_call.1']
  %s0 = inlined_call_operand.vmem [shape: f32[4,16,8], index: 0, kind: input, shape index: {}]
  %s1 = inlined_call_operand.vmem [shape: f32[4,16,128], index: 1, kind: input, shape index: {}]
  %s2 = inlined_call_operand.vmem [shape: f32[4,16,16], index: 2, kind: input, shape index: {}]
  %s3 = inlined_call_operand.vmem [shape: f32[4,16,16], index: 3, kind: input, shape index: {}]
  %s4 = inlined_call_operand.vmem [shape: f32[8,256], index: 4, kind: input, shape index: {}]
  %s5 = inlined_call_operand.vmem [shape: f32[1,256], index: 5, kind: input, shape index: {}]
  %s6 = inlined_call_operand.vmem [shape: f32[1,16], index: 6, kind: input, shape index: {}]
  %s7 = inlined_call_operand.<no memory space> [shape: f32[1,1], index: 7, kind: input, shape index: {}]
  %s8 = inlined_call_operand.vmem [shape: f32[128,16], index: 8, kind: input, shape index: {}]
  %s9 = inlined_call_operand.vmem [shape: f32[1,16], index: 9, kind: input, shape index: {}]
  %s10 = inlined_call_operand.hbm [shape: f32[4,8,16], index: 10, kind: output, shape index: {}]
  %s11 = sld [smem:[#allocation0]]
  $region73: #{tpu_custom_call.1} parent=0
    _
  %s13 = ssub.s32 1, %s11
  %s14 = scalar_select 0, %s13, %s11
  %v15 = vstv %s7
  %16 = vst [vmem:[#allocation2] sm:$0x1] %v15
  $region1: #{tpu_custom_call.1} parent=0
    #allocation3 [shape = 'u8[8192]{0}', space=vmem, size = 0x2000, scoped, tag = 'output window, operand 0']
    #allocation4 [shape = 's32[2]{0}', space=sflag, size = 0x8, scoped, tag = 'scoped memory for tpu_custom_call.1']
    %17 = vsyncpa [#allocation4], 0
    %s18 = scalar_lea.sflag [#allocation4], 1
    %19 = vsyncpa %s18, 0
    loop: start=0, step=1, limit=6
    $region2: #{tpu_custom_call.1} parent=1 // loop_pre_header
      _
    $region3: #{tpu_custom_call.1} parent=1 // loop_header
      %s21 = sphi 0, %s25
      %p22 = scmp.ge.s32.totalorder %s21, 6
      %s31 = sphi 0, %s33
      %s34 = sphi 0, %s31
      %s35 = sphi 0, %s34
      %s51 = sphi 0, %s35
      %s57 = sphi 0, %s59
      %s60 = sphi 0, %s57
      %s61 = sphi 0, %s60
      %s77 = sphi 0, %s61
      %s83 = sphi 0, %s85
      %s86 = sphi 0, %s83
      %s87 = sphi 0, %s86
      %s103 = sphi 0, %s87
      %s109 = sphi 0, %s111
      %s112 = sphi 0, %s109
      %s113 = sphi 0, %s112
      %s129 = sphi 0, %s113
      %s133 = sphi 0, %s133
      %s135 = sphi 0, %s133
      %s136 = sphi 0, %s135
      %s150 = sphi 0, %s136
      %s154 = sphi 0, %s154
      %s156 = sphi 0, %s154
      %s157 = sphi 0, %s156
      %s171 = sphi 0, %s157
      %s175 = sphi 0, %s175
      %s177 = sphi 0, %s175
      %s178 = sphi 0, %s177
      %s192 = sphi 0, %s178
      %s196 = sphi 0, %s196
      %s198 = sphi 0, %s196
      %s199 = sphi 0, %s198
      %s213 = sphi 0, %s199
      %s217 = sphi 0, %s217
      %s219 = sphi 0, %s217
      %s220 = sphi 0, %s219
      %s234 = sphi 0, %s220
      %s238 = sphi 0, %s238
      %s240 = sphi 0, %s238
      %s241 = sphi 0, %s240
      %s255 = sphi 0, %s241
      %s261 = sphi 0, %s263
      %s264 = sphi 0, %s261
      %s265 = sphi 0, %s264
      %s281 = sphi 0, %s265
    $region4: #{tpu_custom_call.1} parent=1 // loop_header_branch
      %24 = sbr.rel (%p22) target = $region8
    $region5: #{tpu_custom_call.1} parent=1 // loop_body
      %s26 = ssub.s32 %s21, 1
      %s27 = ssub.s32 %s21, 2
      %s28 = sadd.s32 %s21, 1
      %s29 = ssub.s32 %s21, %s28
      %p30 = scmp.eq.s32.totalorder %s29, 0
      %s32 = sadd.s32 %s31, 1
      %s33 = scalar_select %p30, %s31, %s32
      %p36 = pneg %p30
      %p37 = scmp.eq.s32.totalorder %s21, 3
      %p38 = por %p36, %p37
      %p39 = scmp.ne.s32.totalorder %s31, %s34
      %p40 = scmp.eq.s32.totalorder %s21, 0
      %p41 = por %p39, %p40
      %p42 = scmp.ne.s32.totalorder %s31, %s34
      %p43 = scmp.eq.s32.totalorder %s26, 3
      %p44 = por %p42, %p43
      %p45 = scmp.ne.s32.totalorder %s34, %s35
      %p46 = scmp.eq.s32.totalorder %s26, 0
      %p47 = por %p45, %p46
      %p48 = scmp.ne.s32.totalorder %s34, %s35
      %p49 = scmp.eq.s32.totalorder %s27, 3
      %p50 = por %p48, %p49
      %p52 = scmp.ne.s32.totalorder %s35, %s51
      %p53 = scmp.eq.s32.totalorder %s27, 0
      %p54 = por %p52, %p53
      %s55 = ssub.s32 %s21, %s28
      %p56 = scmp.eq.s32.totalorder %s55, 0
      %s58 = sadd.s32 %s57, 1
      %s59 = scalar_select %p56, %s57, %s58
      %p62 = pneg %p56
      %p63 = scmp.eq.s32.totalorder %s21, 3
      %p64 = por %p62, %p63
      %p65 = scmp.ne.s32.totalorder %s57, %s60
      %p66 = scmp.eq.s32.totalorder %s21, 0
      %p67 = por %p65, %p66
      %p68 = scmp.ne.s32.totalorder %s57, %s60
      %p69 = scmp.eq.s32.totalorder %s26, 3
      %p70 = por %p68, %p69
      %p71 = scmp.ne.s32.totalorder %s60, %s61
      %p72 = scmp.eq.s32.totalorder %s26, 0
      %p73 = por %p71, %p72
      %p74 = scmp.ne.s32.totalorder %s60, %s61
      %p75 = scmp.eq.s32.totalorder %s27, 3
      %p76 = por %p74, %p75
      %p78 = scmp.ne.s32.totalorder %s61, %s77
      %p79 = scmp.eq.s32.totalorder %s27, 0
      %p80 = por %p78, %p79
      %s81 = ssub.s32 %s21, %s28
      %p82 = scmp.eq.s32.totalorder %s81, 0
      %s84 = sadd.s32 %s83, 1
      %s85 = scalar_select %p82, %s83, %s84
      %p88 = pneg %p82
      %p89 = scmp.eq.s32.totalorder %s21, 3
      %p90 = por %p88, %p89
      %p91 = scmp.ne.s32.totalorder %s83, %s86
      %p92 = scmp.eq.s32.totalorder %s21, 0
      %p93 = por %p91, %p92
      %p94 = scmp.ne.s32.totalorder %s83, %s86
      %p95 = scmp.eq.s32.totalorder %s26, 3
      %p96 = por %p94, %p95
      %p97 = scmp.ne.s32.totalorder %s86, %s87
      %p98 = scmp.eq.s32.totalorder %s26, 0
      %p99 = por %p97, %p98
      %p100 = scmp.ne.s32.totalorder %s86, %s87
      %p101 = scmp.eq.s32.totalorder %s27, 3
      %p102 = por %p100, %p101
      %p104 = scmp.ne.s32.totalorder %s87, %s103
      %p105 = scmp.eq.s32.totalorder %s27, 0
      %p106 = por %p104, %p105
      %s107 = ssub.s32 %s21, %s28
      %p108 = scmp.eq.s32.totalorder %s107, 0
      %s110 = sadd.s32 %s109, 1
      %s111 = scalar_select %p108, %s109, %s110
      %p114 = pneg %p108
      %p115 = scmp.eq.s32.totalorder %s21, 3
      %p116 = por %p114, %p115
      %p117 = scmp.ne.s32.totalorder %s109, %s112
      %p118 = scmp.eq.s32.totalorder %s21, 0
      %p119 = por %p117, %p118
      %p120 = scmp.ne.s32.totalorder %s109, %s112
      %p121 = scmp.eq.s32.totalorder %s26, 3
      %p122 = por %p120, %p121
      %p123 = scmp.ne.s32.totalorder %s112, %s113
      %p124 = scmp.eq.s32.totalorder %s26, 0
      %p125 = por %p123, %p124
      %p126 = scmp.ne.s32.totalorder %s112, %s113
      %p127 = scmp.eq.s32.totalorder %s27, 3
      %p128 = por %p126, %p127
      %p130 = scmp.ne.s32.totalorder %s113, %s129
      %p131 = scmp.eq.s32.totalorder %s27, 0
      %p132 = por %p130, %p131
      %s134 = sadd.s32 %s133, 1
      %p137 = scmp.eq.s32.totalorder %s21, 3
      %p138 = scmp.ne.s32.totalorder %s133, %s135
      %p139 = scmp.eq.s32.totalorder %s21, 0
      %p140 = por %p138, %p139
      %p141 = scmp.ne.s32.totalorder %s133, %s135
      %p142 = scmp.eq.s32.totalorder %s26, 3
      %p143 = por %p141, %p142
      %p144 = scmp.ne.s32.totalorder %s135, %s136
      %p145 = scmp.eq.s32.totalorder %s26, 0
      %p146 = por %p144, %p145
      %p147 = scmp.ne.s32.totalorder %s135, %s136
      %p148 = scmp.eq.s32.totalorder %s27, 3
      %p149 = por %p147, %p148
      %p151 = scmp.ne.s32.totalorder %s136, %s150
      %p152 = scmp.eq.s32.totalorder %s27, 0
      %p153 = por %p151, %p152
      %s155 = sadd.s32 %s154, 1
      %p158 = scmp.eq.s32.totalorder %s21, 3
      %p159 = scmp.ne.s32.totalorder %s154, %s156
      %p160 = scmp.eq.s32.totalorder %s21, 0
      %p161 = por %p159, %p160
      %p162 = scmp.ne.s32.totalorder %s154, %s156
      %p163 = scmp.eq.s32.totalorder %s26, 3
      %p164 = por %p162, %p163
      %p165 = scmp.ne.s32.totalorder %s156, %s157
      %p166 = scmp.eq.s32.totalorder %s26, 0
      %p167 = por %p165, %p166
      %p168 = scmp.ne.s32.totalorder %s156, %s157
      %p169 = scmp.eq.s32.totalorder %s27, 3
      %p170 = por %p168, %p169
      %p172 = scmp.ne.s32.totalorder %s157, %s171
      %p173 = scmp.eq.s32.totalorder %s27, 0
      %p174 = por %p172, %p173
      %s176 = sadd.s32 %s175, 1
      %p179 = scmp.eq.s32.totalorder %s21, 3
      %p180 = scmp.ne.s32.totalorder %s175, %s177
      %p181 = scmp.eq.s32.totalorder %s21, 0
      %p182 = por %p180, %p181
      %p183 = scmp.ne.s32.totalorder %s175, %s177
      %p184 = scmp.eq.s32.totalorder %s26, 3
      %p185 = por %p183, %p184
      %p186 = scmp.ne.s32.totalorder %s177, %s178
      %p187 = scmp.eq.s32.totalorder %s26, 0
      %p188 = por %p186, %p187
      %p189 = scmp.ne.s32.totalorder %s177, %s178
      %p190 = scmp.eq.s32.totalorder %s27, 3
      %p191 = por %p189, %p190
      %p193 = scmp.ne.s32.totalorder %s178, %s192
      %p194 = scmp.eq.s32.totalorder %s27, 0
      %p195 = por %p193, %p194
      %s197 = sadd.s32 %s196, 1
      %p200 = scmp.eq.s32.totalorder %s21, 3
      %p201 = scmp.ne.s32.totalorder %s196, %s198
      %p202 = scmp.eq.s32.totalorder %s21, 0
      %p203 = por %p201, %p202
      %p204 = scmp.ne.s32.totalorder %s196, %s198
      %p205 = scmp.eq.s32.totalorder %s26, 3
      %p206 = por %p204, %p205
      %p207 = scmp.ne.s32.totalorder %s198, %s199
      %p208 = scmp.eq.s32.totalorder %s26, 0
      %p209 = por %p207, %p208
      %p210 = scmp.ne.s32.totalorder %s198, %s199
      %p211 = scmp.eq.s32.totalorder %s27, 3
      %p212 = por %p210, %p211
      %p214 = scmp.ne.s32.totalorder %s199, %s213
      %p215 = scmp.eq.s32.totalorder %s27, 0
      %p216 = por %p214, %p215
      %s218 = sadd.s32 %s217, 1
      %p221 = scmp.eq.s32.totalorder %s21, 3
      %p222 = scmp.ne.s32.totalorder %s217, %s219
      %p223 = scmp.eq.s32.totalorder %s21, 0
      %p224 = por %p222, %p223
      %p225 = scmp.ne.s32.totalorder %s217, %s219
      %p226 = scmp.eq.s32.totalorder %s26, 3
      %p227 = por %p225, %p226
      %p228 = scmp.ne.s32.totalorder %s219, %s220
      %p229 = scmp.eq.s32.totalorder %s26, 0
      %p230 = por %p228, %p229
      %p231 = scmp.ne.s32.totalorder %s219, %s220
      %p232 = scmp.eq.s32.totalorder %s27, 3
      %p233 = por %p231, %p232
      %p235 = scmp.ne.s32.totalorder %s220, %s234
      %p236 = scmp.eq.s32.totalorder %s27, 0
      %p237 = por %p235, %p236
      %s239 = sadd.s32 %s238, 1
      %p242 = scmp.eq.s32.totalorder %s21, 3
      %p243 = scmp.ne.s32.totalorder %s238, %s240
      %p244 = scmp.eq.s32.totalorder %s21, 0
      %p245 = por %p243, %p244
      %p246 = scmp.ne.s32.totalorder %s238, %s240
      %p247 = scmp.eq.s32.totalorder %s26, 3
      %p248 = por %p246, %p247
      %p249 = scmp.ne.s32.totalorder %s240, %s241
      %p250 = scmp.eq.s32.totalorder %s26, 0
      %p251 = por %p249, %p250
      %p252 = scmp.ne.s32.totalorder %s240, %s241
      %p253 = scmp.eq.s32.totalorder %s27, 3
      %p254 = por %p252, %p253
      %p256 = scmp.ne.s32.totalorder %s241, %s255
      %p257 = scmp.eq.s32.totalorder %s27, 0
      %p258 = por %p256, %p257
      %s259 = ssub.s32 %s21, %s28
      %p260 = scmp.eq.s32.totalorder %s259, 0
      %s262 = sadd.s32 %s261, 1
      %s263 = scalar_select %p260, %s261, %s262
      %p266 = pneg %p260
      %p267 = scmp.eq.s32.totalorder %s21, 3
      %p268 = por %p266, %p267
      %p269 = scmp.ne.s32.totalorder %s261, %s264
      %p270 = scmp.eq.s32.totalorder %s21, 0
      %p271 = por %p269, %p270
      %p272 = scmp.ne.s32.totalorder %s261, %s264
      %p273 = scmp.eq.s32.totalorder %s26, 3
      %p274 = por %p272, %p273
      %p275 = scmp.ne.s32.totalorder %s264, %s265
      %p276 = scmp.eq.s32.totalorder %s26, 0
      %p277 = por %p275, %p276
      %p278 = scmp.ne.s32.totalorder %s264, %s265
      %p279 = scmp.eq.s32.totalorder %s27, 3
      %p280 = por %p278, %p279
      %p282 = scmp.ne.s32.totalorder %s265, %s281
      %p283 = scmp.eq.s32.totalorder %s27, 0
      %p284 = por %p282, %p283
      %p285 = scmp.le.s32.totalorder 1, %s21
      %p286 = scmp.lt.s32.totalorder %s21, 5
      %p287 = pnand %p285, %p286
      %p288 = pneg %p287
      // Predicated region
      $region9: #{tpu_custom_call.1} parent=5 // pred_check
        _
      $region10: #{tpu_custom_call.1} parent=5 // pred_check_branch
        %290 = sbr.rel (%p287) target = $region12
      $region11: #{tpu_custom_call.1} parent=5 // pred_region
        %s291 = ssub.s32 %s21, 1
        // Predicated region
        $region13: #{tpu_custom_call.1} parent=11 // pred_check
          %p292 = pneg %p146
        $region14: #{tpu_custom_call.1} parent=11 // pred_check_branch
          %294 = sbr.rel (%p292) target = $region16
        $region15: #{tpu_custom_call.1} parent=11 // pred_region
          _
        $region16: #{tpu_custom_call.1} parent=11 // pred_fallthru
          _
        // Predicated region
        $region17: #{tpu_custom_call.1} parent=11 // pred_check
          %p295 = pneg %p167
        $region18: #{tpu_custom_call.1} parent=11 // pred_check_branch
          %297 = sbr.rel (%p295) target = $region20
        $region19: #{tpu_custom_call.1} parent=11 // pred_region
          _
        $region20: #{tpu_custom_call.1} parent=11 // pred_fallthru
          _
        // Predicated region
        $region21: #{tpu_custom_call.1} parent=11 // pred_check
          %p298 = pneg %p188
        $region22: #{tpu_custom_call.1} parent=11 // pred_check_branch
          %300 = sbr.rel (%p298) target = $region24
        $region23: #{tpu_custom_call.1} parent=11 // pred_region
          _
        $region24: #{tpu_custom_call.1} parent=11 // pred_fallthru
          _
        // Predicated region
        $region25: #{tpu_custom_call.1} parent=11 // pred_check
          %p301 = pneg %p209
        $region26: #{tpu_custom_call.1} parent=11 // pred_check_branch
          %303 = sbr.rel (%p301) target = $region28
        $region27: #{tpu_custom_call.1} parent=11 // pred_region
          _
        $region28: #{tpu_custom_call.1} parent=11 // pred_fallthru
          _
        // Predicated region
        $region29: #{tpu_custom_call.1} parent=11 // pred_check
          %p304 = pneg %p230
        $region30: #{tpu_custom_call.1} parent=11 // pred_check_branch
          %306 = sbr.rel (%p304) target = $region32
        $region31: #{tpu_custom_call.1} parent=11 // pred_region
          _
        $region32: #{tpu_custom_call.1} parent=11 // pred_fallthru
          _
        // Predicated region
        $region33: #{tpu_custom_call.1} parent=11 // pred_check
          %p307 = pneg %p251
        $region34: #{tpu_custom_call.1} parent=11 // pred_check_branch
          %309 = sbr.rel (%p307) target = $region36
        $region35: #{tpu_custom_call.1} parent=11 // pred_region
          _
        $region36: #{tpu_custom_call.1} parent=11 // pred_fallthru
          _
      $region12: #{tpu_custom_call.1} parent=5 // pred_fallthru
        _
      %p310 = scmp.lt.s32.totalorder %s21, 4
      // Predicated region
      $region37: #{tpu_custom_call.1} parent=5 // pred_check
        %p311 = pneg %p310
      $region38: #{tpu_custom_call.1} parent=5 // pred_check_branch
        %313 = sbr.rel (%p311) target = $region40
      $region39: #{tpu_custom_call.1} parent=5 // pred_region
        // Predicated region
        $region41: #{tpu_custom_call.1} parent=39 // pred_check
          %p314 = pneg %p41
        $region42: #{tpu_custom_call.1} parent=39 // pred_check_branch
          %316 = sbr.rel (%p314) target = $region44
        $region43: #{tpu_custom_call.1} parent=39 // pred_region
          %p317 = scmp.lt.s32.totalorder %s21, 3
          %s318 = scalar_select %p317, %s21, 3
          %s319 = smul.addr %s318, 2
          %s320 = smul.addr %s319, 8
          %s321 = scalar_lea.vmem %s0, %s320
        $region44: #{tpu_custom_call.1} parent=39 // pred_fallthru
          _
        // Predicated region
        $region45: #{tpu_custom_call.1} parent=39 // pred_check
          %p322 = pneg %p67
        $region46: #{tpu_custom_call.1} parent=39 // pred_check_branch
          %324 = sbr.rel (%p322) target = $region48
        $region47: #{tpu_custom_call.1} parent=39 // pred_region
          %p325 = scmp.lt.s32.totalorder %s21, 3
          %s326 = scalar_select %p325, %s21, 3
          %s327 = smul.addr %s326, 2
          %s328 = smul.addr %s327, 8
          %s329 = scalar_lea.vmem %s1, %s328
        $region48: #{tpu_custom_call.1} parent=39 // pred_fallthru
          _
        // Predicated region
        $region49: #{tpu_custom_call.1} parent=39 // pred_check
          %p330 = pneg %p93
        $region50: #{tpu_custom_call.1} parent=39 // pred_check_branch
          %332 = sbr.rel (%p330) target = $region52
        $region51: #{tpu_custom_call.1} parent=39 // pred_region
          %p333 = scmp.lt.s32.totalorder %s21, 3
          %s334 = scalar_select %p333, %s21, 3
          %s335 = smul.addr %s334, 2
          %s336 = smul.addr %s335, 8
          %s337 = scalar_lea.vmem %s2, %s336
        $region52: #{tpu_custom_call.1} parent=39 // pred_fallthru
          _
        // Predicated region
        $region53: #{tpu_custom_call.1} parent=39 // pred_check
          %p338 = pneg %p119
        $region54: #{tpu_custom_call.1} parent=39 // pred_check_branch
          %340 = sbr.rel (%p338) target = $region56
        $region55: #{tpu_custom_call.1} parent=39 // pred_region
          %p341 = scmp.lt.s32.totalorder %s21, 3
          %s342 = scalar_select %p341, %s21, 3
          %s343 = smul.addr %s342, 2
          %s344 = smul.addr %s343, 8
          %s345 = scalar_lea.vmem %s3, %s344
        $region56: #{tpu_custom_call.1} parent=39 // pred_fallthru
          _
      $region40: #{tpu_custom_call.1} parent=5 // pred_fallthru
        _
      %p346 = scmp.le.s32.totalorder 1, %s21
      %p347 = scmp.lt.s32.totalorder %s21, 5
      %p348 = pnand %p346, %p347
      %p349 = pneg %p348
      // Predicated region
      $region57: #{tpu_custom_call.1} parent=5 // pred_check
        _
      $region58: #{tpu_custom_call.1} parent=5 // pred_check_branch
        %351 = sbr.rel (%p348) target = $region60
      $region59: #{tpu_custom_call.1} parent=5 // pred_region
        %s352 = ssub.s32 %s21, 1
        %p353 = scmp.lt.s32.totalorder %s26, 3
        %s354 = scalar_select %p353, %s26, 3
        %s355 = smul.addr %s354, 2
        %s356 = smul.addr %s355, 8
        %s357 = scalar_lea.vmem %s0, %s356
        %p358 = pneg %p47
        %p359 = pneg %p44
        %p360 = scmp.lt.s32.totalorder %s26, 3
        %s361 = scalar_select %p360, %s26, 3
        %s362 = smul.addr %s361, 2
        %s363 = smul.addr %s362, 8
        %s364 = scalar_lea.vmem %s1, %s363
        %p365 = pneg %p73
        %p366 = pneg %p70
        %p367 = scmp.lt.s32.totalorder %s26, 3
        %s368 = scalar_select %p367, %s26, 3
        %s369 = smul.addr %s368, 2
        %s370 = smul.addr %s369, 8
        %s371 = scalar_lea.vmem %s2, %s370
        %p372 = pneg %p99
        %p373 = pneg %p96
        %p374 = scmp.lt.s32.totalorder %s26, 3
        %s375 = scalar_select %p374, %s26, 3
        %s376 = smul.addr %s375, 2
        %s377 = smul.addr %s376, 8
        %s378 = scalar_lea.vmem %s3, %s377
        %p379 = pneg %p125
        %p380 = pneg %p122
        %p381 = pneg %p146
        %p382 = pneg %p143
        %p383 = pneg %p167
        %p384 = pneg %p164
        %p385 = pneg %p188
        %p386 = pneg %p185
        %p387 = pneg %p209
        %p388 = pneg %p206
        %p389 = pneg %p230
        %p390 = pneg %p227
        %p391 = pneg %p251
        %p392 = pneg %p248
        %p393 = pneg %p277
        %p394 = pneg %p274
        %s395 = sand.u32 %s264, 1
        %s396 = scalar_lea.sflag [#allocation4], %s395
        %s397 = sand.u32 %s264, 1
        %s398 = smul.addr %s397, 8
        %s399 = scalar_lea.vmem [#allocation3], %s398
        %p400 = scmp.lt.s32.totalorder %s26, 3
        %s401 = scalar_select %p400, %s26, 3
        %s402 = smul.addr %s401, 2
        %s403 = smul.addr %s402, 8
        %s404 = scalar_lea.vmem %s0, %s403
        %p405 = scmp.lt.s32.totalorder %s26, 3
        %s406 = scalar_select %p405, %s26, 3
        %s407 = smul.addr %s406, 2
        %s408 = smul.addr %s407, 8
        %s409 = scalar_lea.vmem %s1, %s408
        %p410 = scmp.lt.s32.totalorder %s26, 3
        %s411 = scalar_select %p410, %s26, 3
        %s412 = smul.addr %s411, 2
        %s413 = smul.addr %s412, 8
        %s414 = scalar_lea.vmem %s2, %s413
        %p415 = scmp.lt.s32.totalorder %s26, 3
        %s416 = scalar_select %p415, %s26, 3
        %s417 = smul.addr %s416, 2
        %s418 = smul.addr %s417, 8
        %s419 = scalar_lea.vmem %s3, %s418
        %v420 = vld [vmem:[%s404] sm:$0xff]
        %v421 = vld [vmem:[%s404 + $0x8] sm:$0xff]
        %v422 = vld [vmem:[%s4] sm:$0xff]
        %v423 = vld [vmem:[%s4 + $0x8] sm:$0xff]
        %v424 = vld [vmem:[%s5] sm:$0x3]
        %v426 = vlaneseq
        %v427 = vshrl.u32 %v426, 7
        %v428 = vsub.s32 0, %v427
        %v429 = vrot.slane %v424, %v428
        %v430 = vlaneseq
        %v431 = vshrl.u32 %v430, 7
        %v432 = vsub.s32 1, %v431
        %v433 = vrot.slane %v424, %v432
        %vm436 = vcmask 64512
        %v438 = vsel %vm436, %v420, 0
        %v441 = vsel %vm436, %v421, 0
        %443 = vmatprep.subr.mxu0 %v423
        %444 = vmatpush1.msra.mxu0 %v422
        %445 = vmatprep.subr.mxu0 0.0
        %446 = vmatpush1.msra.mxu0 0.0
        %447 = vmatprep.subr.mxu0 0.0
        %448 = vmatpush1.msra.mxu0 0.0
        %449 = vmatprep.subr.mxu0 0.0
        %450 = vmatpush1.msra.mxu0 0.0
        %451 = vmatprep.subr.mxu0 0.0
        %452 = vmatpush1.msra.mxu0 0.0
        %453 = vmatprep.subr.mxu0 0.0
        %454 = vmatpush1.msra.mxu0 0.0
        %455 = vmatprep.subr.mxu0 0.0
        %456 = vmatpush1.msra.mxu0 0.0
        %457 = vmatprep.subr.mxu0 0.0
        %458 = vmatpush1.msra.mxu0 0.0
        %459 = vmatprep.subr.mxu0 0.0
        %460 = vmatpush1.msra.mxu0 0.0
        %461 = vmatprep.subr.mxu0 0.0
        %462 = vmatpush1.msra.mxu0 0.0
        %463 = vmatprep.subr.mxu0 0.0
        %464 = vmatpush1.msra.mxu0 0.0
        %465 = vmatprep.subr.mxu0 0.0
        %466 = vmatpush1.msra.mxu0 0.0
        %467 = vmatprep.subr.mxu0 0.0
        %468 = vmatpush1.msra.mxu0 0.0
        %469 = vmatprep.subr.mxu0 0.0
        %470 = vmatpush1.msra.mxu0 0.0
        %471 = vmatprep.subr.mxu0 0.0
        %472 = vmatpush1.msra.mxu0 0.0
        %473 = vmatprep.subr.mxu0 0.0
        %474 = vmatpush1.msra.mxu0 0.0
        %475 = vmatprep.subr.mxu0 0.0
        %476 = vmatpush1.msra.mxu0 0.0
        %477 = vmatprep.subr.mxu0 0.0
        %478 = vmatpush1.msra.mxu0 0.0
        %479 = vmatprep.subr.mxu0 0.0
        %480 = vmatpush1.msra.mxu0 0.0
        %481 = vmatprep.subr.mxu0 0.0
        %482 = vmatpush1.msra.mxu0 0.0
        %483 = vmatprep.subr.mxu0 0.0
        %484 = vmatpush1.msra.mxu0 0.0
        %485 = vmatprep.subr.mxu0 0.0
        %486 = vmatpush1.msra.mxu0 0.0
        %487 = vmatprep.subr.mxu0 0.0
        %488 = vmatpush1.msra.mxu0 0.0
        %489 = vmatprep.subr.mxu0 0.0
        %490 = vmatpush1.msra.mxu0 0.0
        %491 = vmatprep.subr.mxu0 0.0
        %492 = vmatpush1.msra.mxu0 0.0
        %493 = vmatprep.subr.mxu0 0.0
        %494 = vmatpush1.msra.mxu0 0.0
        %495 = vmatprep.subr.mxu0 0.0
        %496 = vmatpush1.msra.mxu0 0.0
        %497 = vmatprep.subr.mxu0 0.0
        %498 = vmatpush1.msra.mxu0 0.0
        %499 = vmatprep.subr.mxu0 0.0
        %500 = vmatpush1.msra.mxu0 0.0
        %501 = vmatprep.subr.mxu0 0.0
        %502 = vmatpush1.msra.mxu0 0.0
        %503 = vmatprep.subr.mxu0 0.0
        %504 = vmatpush1.msra.mxu0 0.0
        %505 = vmatprep.subr.mxu0 0.0
        %506 = vmatpush1.msra.mxu0 0.0
        %507 = vmatprep.mubr.f32.mxu0 0.0
        %508 = vmatmul.mubr.f32.gmra.mrb[0].mxu0 %v438
        %v509 = vpop.f32.mrb[0].mxu0
        %v510 = vadd.f32 %v429, %v509
        %v511 = vpop.f32.mrb[0].mxu0
        %v512 = vadd.f32 %v433, %v511
        %513 = vmatprep.mubr.f32.mxu0 0.0
        %514 = vmatmul.mubr.f32.gmra.mrb[0].mxu0 %v441
        %v515 = vpop.f32.mrb[0].mxu0
        %v516 = vadd.f32 %v429, %v515
        %v517 = vpop.f32.mrb[0].mxu0
        %v518 = vadd.f32 %v433, %v517
        %519 = vdwg.mxu0
        %v520 = vld [vmem:[%s409] sm:$0xff]
        %v521 = vld [vmem:[%s409 + $0x8] sm:$0xff]
        %v522 = vmul.f32 %v520, %v510
        %v523 = vmul.f32 %v521, %v516
        %v524 = vmul.f32 %v520, %v512
        %v525 = vmul.f32 %v521, %v518
        %v526 = vld [vmem:[%s8] sm:$0xff]
        %v527 = vld [vmem:[%s8 + $0x8] sm:$0xff]
        %v528 = vld [vmem:[%s8 + $0x10] sm:$0xff]
        %v529 = vld [vmem:[%s8 + $0x18] sm:$0xff]
        %v530 = vld [vmem:[%s8 + $0x20] sm:$0xff]
        %v531 = vld [vmem:[%s8 + $0x28] sm:$0xff]
        %v532 = vld [vmem:[%s8 + $0x30] sm:$0xff]
        %v533 = vld [vmem:[%s8 + $0x38] sm:$0xff]
        %v534 = vld [vmem:[%s8 + $0x40] sm:$0xff]
        %v535 = vld [vmem:[%s8 + $0x48] sm:$0xff]
        %v536 = vld [vmem:[%s8 + $0x50] sm:$0xff]
        %v537 = vld [vmem:[%s8 + $0x58] sm:$0xff]
        %v538 = vld [vmem:[%s8 + $0x60] sm:$0xff]
        %v539 = vld [vmem:[%s8 + $0x68] sm:$0xff]
        %v540 = vld [vmem:[%s8 + $0x70] sm:$0xff]
        %v541 = vld [vmem:[%s8 + $0x78] sm:$0xff]
        %542 = vmatprep.subr.mxu0 0.0
        %543 = vmatpush1.msra.mxu0 %v526
        %544 = vmatprep.subr.mxu0 0.0
        %545 = vmatpush1.msra.mxu0 %v527
        %546 = vmatprep.subr.mxu0 0.0
        %547 = vmatpush1.msra.mxu0 %v528
        %548 = vmatprep.subr.mxu0 0.0
        %549 = vmatpush1.msra.mxu0 %v529
        %550 = vmatprep.subr.mxu0 0.0
        %551 = vmatpush1.msra.mxu0 %v530
        %552 = vmatprep.subr.mxu0 0.0
        %553 = vmatpush1.msra.mxu0 %v531
        %554 = vmatprep.subr.mxu0 0.0
        %555 = vmatpush1.msra.mxu0 %v532
        %556 = vmatprep.subr.mxu0 0.0
        %557 = vmatpush1.msra.mxu0 %v533
        %558 = vmatprep.subr.mxu0 0.0
        %559 = vmatpush1.msra.mxu0 %v534
        %560 = vmatprep.subr.mxu0 0.0
        %561 = vmatpush1.msra.mxu0 %v535
        %562 = vmatprep.subr.mxu0 0.0
        %563 = vmatpush1.msra.mxu0 %v536
        %564 = vmatprep.subr.mxu0 0.0
        %565 = vmatpush1.msra.mxu0 %v537
        %566 = vmatprep.subr.mxu0 0.0
        %567 = vmatpush1.msra.mxu0 %v538
        %568 = vmatprep.subr.mxu0 0.0
        %569 = vmatpush1.msra.mxu0 %v539
        %570 = vmatprep.subr.mxu0 0.0
        %571 = vmatpush1.msra.mxu0 %v540
        %572 = vmatprep.subr.mxu0 0.0
        %573 = vmatpush1.msra.mxu0 %v541
        %574 = vmatprep.subr.mxu0 0.0
        %575 = vmatpush1.msra.mxu0 0.0
        %576 = vmatprep.subr.mxu0 0.0
        %577 = vmatpush1.msra.mxu0 0.0
        %578 = vmatprep.subr.mxu0 0.0
        %579 = vmatpush1.msra.mxu0 0.0
        %580 = vmatprep.subr.mxu0 0.0
        %581 = vmatpush1.msra.mxu0 0.0
        %582 = vmatprep.subr.mxu0 0.0
        %583 = vmatpush1.msra.mxu0 0.0
        %584 = vmatprep.subr.mxu0 0.0
        %585 = vmatpush1.msra.mxu0 0.0
        %586 = vmatprep.subr.mxu0 0.0
        %587 = vmatpush1.msra.mxu0 0.0
        %588 = vmatprep.subr.mxu0 0.0
        %589 = vmatpush1.msra.mxu0 0.0
        %590 = vmatprep.subr.mxu0 0.0
        %591 = vmatpush1.msra.mxu0 0.0
        %592 = vmatprep.subr.mxu0 0.0
        %593 = vmatpush1.msra.mxu0 0.0
        %594 = vmatprep.subr.mxu0 0.0
        %595 = vmatpush1.msra.mxu0 0.0
        %596 = vmatprep.subr.mxu0 0.0
        %597 = vmatpush1.msra.mxu0 0.0
        %598 = vmatprep.subr.mxu0 0.0
        %599 = vmatpush1.msra.mxu0 0.0
        %600 = vmatprep.subr.mxu0 0.0
        %601 = vmatpush1.msra.mxu0 0.0
        %602 = vmatprep.subr.mxu0 0.0
        %603 = vmatpush1.msra.mxu0 0.0
        %604 = vmatprep.subr.mxu0 0.0
        %605 = vmatpush1.msra.mxu0 0.0
        %606 = vmatprep.mubr.f32.mxu0 0.0
        %607 = vmatmul.mubr.f32.gmra.mrb[0].mxu0 %v522
        %v608 = vpop.f32.mrb[0].mxu0
        %v609 = vadd.f32 0.0, %v608
        %v610 = vpop.f32.mrb[0].mxu0
        %611 = vmatprep.mubr.f32.mxu0 0.0
        %612 = vmatmul.mubr.f32.gmra.mrb[0].mxu0 %v523
        %v613 = vpop.f32.mrb[0].mxu0
        %v614 = vadd.f32 0.0, %v613
        %v615 = vpop.f32.mrb[0].mxu0
        %616 = vmatprep.mubr.f32.mxu0 0.0
        %617 = vmatmul.mubr.f32.gmra.mrb[0].mxu0 %v524
        %v618 = vpop.f32.mrb[0].mxu0
        %v619 = vadd.f32 0.0, %v618
        %v620 = vpop.f32.mrb[0].mxu0
        %621 = vmatprep.mubr.f32.mxu0 0.0
        %622 = vmatmul.mubr.f32.gmra.mrb[0].mxu0 %v525
        %v623 = vpop.f32.mrb[0].mxu0
        %v624 = vadd.f32 0.0, %v623
        %v625 = vpop.f32.mrb[0].mxu0
        %626 = vdwg.mxu0
        %v627 = vld [vmem:[%s6] sm:$0x1]
        %v628 = vld [vmem:[%s414] sm:$0xff]
        %v629 = vld [vmem:[%s414 + $0x8] sm:$0xff]
        %v630 = vld [vmem:[#allocation2] sm:$0x1]
        %632 = vset.pattern.permute.xlu0 0
        %633 = vperm.xlu0 %632, %v630
        %v634 = vpop.permute.xlu0 %633
        %v636 = vlaneseq
        %v637 = vshrl.u32 %v636, 7
        %v638 = vsub.s32 0, %v637
        %v639 = vrot.slane %v634, %v638
        %vm640 = vcmask 130048
        %v642 = vsel %vm640, %v627, 0
        %644 = vmatprep.subr.mxu0 0.0
        %645 = vmatpush1.msra.mxu0 %v628
        %646 = vmatprep.subr.mxu0 0.0
        %647 = vmatpush1.msra.mxu0 %v629
        %648 = vmatprep.subr.mxu0 0.0
        %649 = vmatpush1.msra.mxu0 0.0
        %650 = vmatprep.subr.mxu0 0.0
        %651 = vmatpush1.msra.mxu0 0.0
        %652 = vmatprep.subr.mxu0 0.0
        %653 = vmatpush1.msra.mxu0 0.0
        %654 = vmatprep.subr.mxu0 0.0
        %655 = vmatpush1.msra.mxu0 0.0
        %656 = vmatprep.subr.mxu0 0.0
        %657 = vmatpush1.msra.mxu0 0.0
        %658 = vmatprep.subr.mxu0 0.0
        %659 = vmatpush1.msra.mxu0 0.0
        %660 = vmatprep.subr.mxu0 0.0
        %661 = vmatpush1.msra.mxu0 0.0
        %662 = vmatprep.subr.mxu0 0.0
        %663 = vmatpush1.msra.mxu0 0.0
        %664 = vmatprep.subr.mxu0 0.0
        %665 = vmatpush1.msra.mxu0 0.0
        %666 = vmatprep.subr.mxu0 0.0
        %667 = vmatpush1.msra.mxu0 0.0
        %668 = vmatprep.subr.mxu0 0.0
        %669 = vmatpush1.msra.mxu0 0.0
        %670 = vmatprep.subr.mxu0 0.0
        %671 = vmatpush1.msra.mxu0 0.0
        %672 = vmatprep.subr.mxu0 0.0
        %673 = vmatpush1.msra.mxu0 0.0
        %674 = vmatprep.subr.mxu0 0.0
        %675 = vmatpush1.msra.mxu0 0.0
        %676 = vmatprep.subr.mxu0 0.0
        %677 = vmatpush1.msra.mxu0 0.0
        %678 = vmatprep.subr.mxu0 0.0
        %679 = vmatpush1.msra.mxu0 0.0
        %680 = vmatprep.subr.mxu0 0.0
        %681 = vmatpush1.msra.mxu0 0.0
        %682 = vmatprep.subr.mxu0 0.0
        %683 = vmatpush1.msra.mxu0 0.0
        %684 = vmatprep.subr.mxu0 0.0
        %685 = vmatpush1.msra.mxu0 0.0
        %686 = vmatprep.subr.mxu0 0.0
        %687 = vmatpush1.msra.mxu0 0.0
        %688 = vmatprep.subr.mxu0 0.0
        %689 = vmatpush1.msra.mxu0 0.0
        %690 = vmatprep.subr.mxu0 0.0
        %691 = vmatpush1.msra.mxu0 0.0
        %692 = vmatprep.subr.mxu0 0.0
        %693 = vmatpush1.msra.mxu0 0.0
        %694 = vmatprep.subr.mxu0 0.0
        %695 = vmatpush1.msra.mxu0 0.0
        %696 = vmatprep.subr.mxu0 0.0
        %697 = vmatpush1.msra.mxu0 0.0
        %698 = vmatprep.subr.mxu0 0.0
        %699 = vmatpush1.msra.mxu0 0.0
        %700 = vmatprep.subr.mxu0 0.0
        %701 = vmatpush1.msra.mxu0 0.0
        %702 = vmatprep.subr.mxu0 0.0
        %703 = vmatpush1.msra.mxu0 0.0
        %704 = vmatprep.subr.mxu0 0.0
        %705 = vmatpush1.msra.mxu0 0.0
        %706 = vmatprep.subr.mxu0 0.0
        %707 = vmatpush1.msra.mxu0 0.0
        %708 = vmatprep.mubr.f32.mxu0 0.0
        %709 = vmatmul.mubr.f32.gmra.mrb[0].mxu0 %v642
        %v710 = vpop.f32.mrb[0].mxu0
        %v711 = vadd.f32 %v639, %v710
        %v712 = vpop.f32.mrb[0].mxu0
        %713 = vdwg.mxu0
        %vm714 = vcmp.ge.f32.partialorder %v711, 0.0
        %v715 = vmul.f32 %v711, 0.01
        %v716 = vsel %vm714, %v711, %v715
        %v717 = vld [vmem:[%s419] sm:$0xff]
        %v718 = vld [vmem:[%s419 + $0x8] sm:$0xff]
        %vm719 = vcmp.gt.f32.partialorder %v717, 0.0
        %vm720 = vcmp.gt.f32.partialorder %v718, 0.0
        %v721 = vlaneseq
        %v722 = vshrl.u32 %v721, 7
        %v723 = vsub.s32 0, %v722
        %v724 = vrot.slane %v716, %v723
        %v725 = vsel %vm719, %v724, -1e+30
        %v726 = vsel %vm720, %v724, -1e+30
        %v727 = vsel %vm640, %v725, -inf
        %728 = vmax.xlane.f32.xlu0 %v727
        %v729 = vpop.xlane.xlu0 %728
        %v730 = vsel %vm640, %v726, -inf
        %731 = vmax.xlane.f32.xlu0 %v730
        %v732 = vpop.xlane.xlu0 %731
        %v733 = vsub.f32 %v725, %v729
        %v734 = vsub.f32 %v726, %v732
        %v735 = vmul.f32 %v733, 1.442695
        %v736 = vpow.pop %v735
        %v737 = vmul.f32 %v734, 1.442695
        %v738 = vpow.pop %v737
        %v739 = vmul.f32 %v736, %v717
        %v740 = vmul.f32 %v738, %v718
        %v741 = vsel %vm640, %v739, 0.0
        %742 = vadd.xlane.f32.xlu0 %v741
        %v743 = vpop.xlane.xlu0 %742
        %v744 = vsel %vm640, %v740, 0.0
        %745 = vadd.xlane.f32.xlu0 %v744
        %v746 = vpop.xlane.xlu0 %745
        %v747 = vrcp.pop %v743
        %v748 = vrcp.pop %v746
        %vm749 = vcmp.gt.f32.partialorder %v743, 0.0
        %vm750 = vcmp.gt.f32.partialorder %v746, 0.0
        %v751 = vsel %vm749, %v747, 0.0
        %v752 = vsel %vm750, %v748, 0.0
        %v753 = vmul.f32 %v739, %v751
        %v754 = vmul.f32 %v740, %v752
        %756 = vrot.lane.b32.xlu0 %v754, 16
        %v757 = vpop.permute.xlu0 %756
        %v759 = vsel %vm640, %v753, %v757
        %v760 = vld [vmem:[%s9] sm:$0x1]
        %v762 = vlaneseq
        %v763 = vshrl.u32 %v762, 7
        %v764 = vsub.s32 0, %v763
        %v765 = vrot.slane %v760, %v764
        %vm767 = vcmask 261120
        %v769 = vsel %vm767, %v759, 0
        %771 = vmatprep.subr.mxu0 0.0
        %772 = vmatpush1.msra.mxu0 %v609
        %773 = vmatprep.subr.mxu0 0.0
        %774 = vmatpush1.msra.mxu0 %v614
        %775 = vmatprep.subr.mxu0 0.0
        %776 = vmatpush1.msra.mxu0 %v619
        %777 = vmatprep.subr.mxu0 0.0
        %778 = vmatpush1.msra.mxu0 %v624
        %779 = vmatprep.subr.mxu0 0.0
        %780 = vmatpush1.msra.mxu0 0.0
        %781 = vmatprep.subr.mxu0 0.0
        %782 = vmatpush1.msra.mxu0 0.0
        %783 = vmatprep.subr.mxu0 0.0
        %784 = vmatpush1.msra.mxu0 0.0
        %785 = vmatprep.subr.mxu0 0.0
        %786 = vmatpush1.msra.mxu0 0.0
        %787 = vmatprep.subr.mxu0 0.0
        %788 = vmatpush1.msra.mxu0 0.0
        %789 = vmatprep.subr.mxu0 0.0
        %790 = vmatpush1.msra.mxu0 0.0
        %791 = vmatprep.subr.mxu0 0.0
        %792 = vmatpush1.msra.mxu0 0.0
        %793 = vmatprep.subr.mxu0 0.0
        %794 = vmatpush1.msra.mxu0 0.0
        %795 = vmatprep.subr.mxu0 0.0
        %796 = vmatpush1.msra.mxu0 0.0
        %797 = vmatprep.subr.mxu0 0.0
        %798 = vmatpush1.msra.mxu0 0.0
        %799 = vmatprep.subr.mxu0 0.0
        %800 = vmatpush1.msra.mxu0 0.0
        %801 = vmatprep.subr.mxu0 0.0
        %802 = vmatpush1.msra.mxu0 0.0
        %803 = vmatprep.subr.mxu0 0.0
        %804 = vmatpush1.msra.mxu0 0.0
        %805 = vmatprep.subr.mxu0 0.0
        %806 = vmatpush1.msra.mxu0 0.0
        %807 = vmatprep.subr.mxu0 0.0
        %808 = vmatpush1.msra.mxu0 0.0
        %809 = vmatprep.subr.mxu0 0.0
        %810 = vmatpush1.msra.mxu0 0.0
        %811 = vmatprep.subr.mxu0 0.0
        %812 = vmatpush1.msra.mxu0 0.0
        %813 = vmatprep.subr.mxu0 0.0
        %814 = vmatpush1.msra.mxu0 0.0
        %815 = vmatprep.subr.mxu0 0.0
        %816 = vmatpush1.msra.mxu0 0.0
        %817 = vmatprep.subr.mxu0 0.0
        %818 = vmatpush1.msra.mxu0 0.0
        %819 = vmatprep.subr.mxu0 0.0
        %820 = vmatpush1.msra.mxu0 0.0
        %821 = vmatprep.subr.mxu0 0.0
        %822 = vmatpush1.msra.mxu0 0.0
        %823 = vmatprep.subr.mxu0 0.0
        %824 = vmatpush1.msra.mxu0 0.0
        %825 = vmatprep.subr.mxu0 0.0
        %826 = vmatpush1.msra.mxu0 0.0
        %827 = vmatprep.subr.mxu0 0.0
        %828 = vmatpush1.msra.mxu0 0.0
        %829 = vmatprep.subr.mxu0 0.0
        %830 = vmatpush1.msra.mxu0 0.0
        %831 = vmatprep.subr.mxu0 0.0
        %832 = vmatpush1.msra.mxu0 0.0
        %833 = vmatprep.subr.mxu0 0.0
        %834 = vmatpush1.msra.mxu0 0.0
        %835 = vmatprep.mubr.f32.mxu0 0.0
        %836 = vmatmul.mubr.f32.gmra.mrb[0].mxu0 %v769
        %v837 = vpop.f32.mrb[0].mxu0
        %v838 = vadd.f32 %v765, %v837
        %v839 = vpop.f32.mrb[0].mxu0
        %840 = vdwg.mxu0
        %841 = vst.msk [vmem:[%s399] sm:$0xff] %vm640, %v838
        %s842 = sand.u32 %s264, 1
        %s843 = scalar_lea.sflag [#allocation4], %s842
        %s844 = sand.u32 %s264, 1
        %s845 = smul.addr %s844, 8
        %s846 = scalar_lea.vmem [#allocation3], %s845
        // Predicated region
        $region61: #{tpu_custom_call.1} parent=59 // pred_check
          %p847 = pneg %p274
        $region62: #{tpu_custom_call.1} parent=59 // pred_check_branch
          %849 = sbr.rel (%p847) target = $region64
        $region63: #{tpu_custom_call.1} parent=59 // pred_region
          %s851 = ssub.s32 128, 128
          %852 = vsyncadd %s843, %s851
          %s853 = smul.addr %s26, 128
          %s854 = scalar_lea.hbm %s10, %s853
          %s856 = sshll.u32 %s846, 4
          %s857 = int_to_ptr.vmem [resolvable:$true] %s856
          %859 = dma.vmem_to_hbm [thread:$0]  %s857, 128, %s854, %s843
        $region64: #{tpu_custom_call.1} parent=59 // pred_fallthru
          _
      $region60: #{tpu_custom_call.1} parent=5 // pred_fallthru
        _
      %p860 = scmp.le.s32.totalorder 2, %s21
      // Predicated region
      $region65: #{tpu_custom_call.1} parent=5 // pred_check
        %p861 = pneg %p860
      $region66: #{tpu_custom_call.1} parent=5 // pred_check_branch
        %863 = sbr.rel (%p861) target = $region68
      $region67: #{tpu_custom_call.1} parent=5 // pred_region
        %s864 = ssub.s32 %s21, 2
        // Predicated region
        $region69: #{tpu_custom_call.1} parent=67 // pred_check
          %p865 = pneg %p280
        $region70: #{tpu_custom_call.1} parent=67 // pred_check_branch
          %867 = sbr.rel (%p865) target = $region72
        $region71: #{tpu_custom_call.1} parent=67 // pred_region
          %s868 = sand.u32 %s265, 1
          %s869 = scalar_lea.sflag [#allocation4], %s868
          %s870 = sand.u32 %s265, 1
          %s871 = smul.addr %s870, 8
          %s872 = scalar_lea.vmem [#allocation3], %s871
          %873 = dma.done %s869, 128
        $region72: #{tpu_custom_call.1} parent=67 // pred_fallthru
          _
      $region68: #{tpu_custom_call.1} parent=5 // pred_fallthru
        _
    $region6: #{tpu_custom_call.1} parent=1 // loop_footer
      %s25 = sadd.s32 1, %s21
    $region7: #{tpu_custom_call.1} parent=1 // loop_footer_branch
      %20 = sbr.rel target = $region3
    $region8: #{tpu_custom_call.1} parent=1 // loop_exit
      _
    %874 = vsyncpa [#allocation4], 1
    %s875 = scalar_lea.sflag [#allocation4], 1
    %876 = vsyncpa %s875, 1

</llo_original>
